<compile_context>
chip_gen: v6e
topology: v6e:2x2x1
jax: 0.10.0
libtpu: 0.0.40
codegen_flags: <defaults>
</compile_context>

<pallas_src>
import jax
import jax.numpy as jnp
from jax.experimental import pallas as pl
from jax.experimental.pallas import tpu as pltpu


_VMEM_LIMIT_BYTES = 32 * 1024 * 1024   # explicit, safe on v5e/v6e/v7x
_DEFAULT_TILE_BYTES = 2 * 1024 * 1024  # per-buffer x-tile budget


# ---------------------------------------------------------------------------
# Tile selection helpers (always pick exact divisors -> no padded blocks).
# ---------------------------------------------------------------------------
def _pick_l_tile(L, C, itemsize, tile_bytes):
    """Largest multiple-of-128 divisor of L whose (C, l_blk) slab fits budget,
    else the full L (a full-extent block is always legal)."""
    if L % 128 != 0:
        return L
    max_l = max(128, (tile_bytes // max(1, C * itemsize)) // 128 * 128)
    best = 128
    m = 256
    while m <= min(L, max_l):
        if L % m == 0:
            best = m
        m += 128
    return best


def _pick_b_tile(B, C, l_blk, itemsize, tile_bytes):
    """Largest divisor of B such that the (b_blk, C, l_blk) tile fits budget."""
    cap = max(1, tile_bytes // max(1, C * l_blk * itemsize))
    cap = min(cap, B)
    for d in range(cap, 0, -1):
        if B % d == 0:
            return d
    return 1


# ---------------------------------------------------------------------------
# Fused single-pass kernel: pool + MLP + sigmoid + rescale in one HBM sweep.
# ---------------------------------------------------------------------------
def _make_fused_kernel(inv_l):
    def kernel(x_ref, w1_ref, b1_ref, w2_ref, b2_ref, out_ref):
        x = x_ref[...].astype(jnp.float32)                 # (Bb, C, L)
        avg = jnp.sum(x, axis=2) * inv_l                   # (Bb, C)
        mx = jnp.max(x, axis=2)                            # (Bb, C)

        def mlp(v):
            h = jnp.dot(v, w1_ref[...],
                        preferred_element_type=jnp.float32) + b1_ref[...]
            h = jnp.maximum(h, 0.0)
            return jnp.dot(h, w2_ref[...],
                           preferred_element_type=jnp.float32) + b2_ref[...]

        att = mlp(avg) + mlp(mx)                           # (Bb, C)
        scale = jax.nn.sigmoid(att)[:, :, None]            # (Bb, C, 1)
        out_ref[...] = (x * scale).astype(out_ref.dtype)

    return kernel


# ---------------------------------------------------------------------------
# Phase A (streaming fallback): running sum / max over L + MLP -> scale.
# ---------------------------------------------------------------------------
def _make_pool_mlp_kernel(inv_l):
    def kernel(x_ref, w1_ref, b1_ref, w2_ref, b2_ref, scale_ref,
               sum_acc, max_acc):
        l_idx = pl.program_id(1)

        @pl.when(l_idx == 0)
        def _init():
            sum_acc[...] = jnp.zeros_like(sum_acc)
            max_acc[...] = jnp.full_like(max_acc, -jnp.inf)

        x = x_ref[...].astype(jnp.float32)                 # (Bb, C, Lb)
        sum_acc[...] = sum_acc[...] + jnp.sum(x, axis=2)
        max_acc[...] = jnp.maximum(max_acc[...], jnp.max(x, axis=2))

        @pl.when(l_idx == pl.num_programs(1) - 1)
        def _finalize():
            def mlp(v):
                h = jnp.dot(v, w1_ref[...],
                            preferred_element_type=jnp.float32) + b1_ref[...]
                h = jnp.maximum(h, 0.0)
                return jnp.dot(h, w2_ref[...],
                               preferred_element_type=jnp.float32) + b2_ref[...]

            att = mlp(sum_acc[...] * inv_l) + mlp(max_acc[...])
            scale_ref[...] = jax.nn.sigmoid(att)[:, :, None].astype(
                scale_ref.dtype)

    return kernel


# ---------------------------------------------------------------------------
# Phase B (streaming fallback): lane-dense rescale  out = x * scale.
# ---------------------------------------------------------------------------
def _scale_kernel(x_ref, scale_ref, out_ref):
    # x: (Bb, C, Lb), scale: (Bb, C, 1) -> broadcast over L.
    out_ref[...] = x_ref[...] * scale_ref[...].astype(x_ref.dtype)


# ---------------------------------------------------------------------------
# Wrapper
# ---------------------------------------------------------------------------
def channel_gate(x, w1, b1, w2, b2, *, tile_bytes=_DEFAULT_TILE_BYTES):
    """x: (B, C, L); w1: (C, H); b1: (H,); w2: (H, C); b2: (C,)."""
    B, C, L = x.shape
    H = w1.shape[1]
    itemsize = x.dtype.itemsize

    b1_2d = b1.reshape(1, H)
    b2_2d = b2.reshape(1, C)
    inv_l = 1.0 / float(L)

    weight_specs = [
        pl.BlockSpec((C, H), lambda *_: (0, 0)),
        pl.BlockSpec((1, H), lambda *_: (0, 0)),
        pl.BlockSpec((H, C), lambda *_: (0, 0)),
        pl.BlockSpec((1, C), lambda *_: (0, 0)),
    ]

    x_bytes = int(x.size) * itemsize
    mlp_flops = int(4 * B * C * H)

    # --- Fast path: whole (C, L) slab per sample fits in a tile --------------
    if C * L * itemsize <= tile_bytes:
        b_blk = _pick_b_tile(B, C, L, itemsize, tile_bytes)
        nb = B // b_blk
        return pl.pallas_call(
            _make_fused_kernel(inv_l),
            out_shape=jax.ShapeDtypeStruct((B, C, L), x.dtype),
            grid=(nb,),
            in_specs=[pl.BlockSpec((b_blk, C, L), lambda b: (b, 0, 0))]
                     + weight_specs,
            out_specs=pl.BlockSpec((b_blk, C, L), lambda b: (b, 0, 0)),
            compiler_params=pltpu.CompilerParams(
                dimension_semantics=("parallel",),
                vmem_limit_bytes=_VMEM_LIMIT_BYTES,
            ),
            cost_estimate=pl.CostEstimate(
                flops=int(3 * x.size) + mlp_flops,
                transcendentals=int(B * C),
                bytes_accessed=2 * x_bytes,
            ),
        )(x, w1, b1_2d, w2, b2_2d)

    # --- Streaming fallback ---------------------------------------------------
    l_blk = _pick_l_tile(L, C, itemsize, tile_bytes)
    b_blk = _pick_b_tile(B, C, l_blk, itemsize, tile_bytes)
    nb, nl = B // b_blk, L // l_blk
    scale_bytes = int(B * C) * 4

    # Phase A: pooled reduction + MLP -> scale (B, C, 1) in f32.
    scale = pl.pallas_call(
        _make_pool_mlp_kernel(inv_l),
        out_shape=jax.ShapeDtypeStruct((B, C, 1), jnp.float32),
        grid=(nb, nl),
        in_specs=[pl.BlockSpec((b_blk, C, l_blk), lambda b, l: (b, 0, l))]
                 + weight_specs,
        out_specs=pl.BlockSpec((b_blk, C, 1), lambda b, l: (b, 0, 0)),
        scratch_shapes=[
            pltpu.VMEM((b_blk, C), jnp.float32),   # running sum
            pltpu.VMEM((b_blk, C), jnp.float32),   # running max
        ],
        compiler_params=pltpu.CompilerParams(
            dimension_semantics=("parallel", "arbitrary"),
            vmem_limit_bytes=_VMEM_LIMIT_BYTES,
        ),
        cost_estimate=pl.CostEstimate(
            flops=int(2 * x.size) + mlp_flops,
            transcendentals=int(B * C),
            bytes_accessed=x_bytes + scale_bytes,
        ),
    )(x, w1, b1_2d, w2, b2_2d)

    # Phase B: tiled elementwise rescale.
    out = pl.pallas_call(
        _scale_kernel,
        out_shape=jax.ShapeDtypeStruct((B, C, L), x.dtype),
        grid=(nb, nl),
        in_specs=[
            pl.BlockSpec((b_blk, C, l_blk), lambda b, l: (b, 0, l)),
            pl.BlockSpec((b_blk, C, 1), lambda b, l: (b, 0, 0)),
        ],
        out_specs=pl.BlockSpec((b_blk, C, l_blk), lambda b, l: (b, 0, l)),
        compiler_params=pltpu.CompilerParams(
            dimension_semantics=("parallel", "parallel"),
            vmem_limit_bytes=_VMEM_LIMIT_BYTES,
        ),
        cost_estimate=pl.CostEstimate(
            flops=int(x.size),
            transcendentals=0,
            bytes_accessed=2 * x_bytes + scale_bytes,
        ),
    )(x, scale)
    return out


def channel_gate_ref(x, w1, b1, w2, b2):
    """Pure-JAX reference mirroring the PyTorch forward."""
    avg_pool = jnp.mean(x, axis=2)
    max_pool = jnp.max(x, axis=2)

    def mlp(v):
        h = jnp.maximum(v @ w1 + b1, 0.0)
        return h @ w2 + b2

    att = mlp(avg_pool) + mlp(max_pool)
    return x * jax.nn.sigmoid(att)[:, :, None]


if __name__ == "__main__":
    # Shapes consistent with the module: gate_channels=32, reduction_ratio=16.
    B, C, L = 2, 32, 16
    H = C // 16  # = 2

    key = jax.random.PRNGKey(0)
    kx, kw1, kb1, kw2, kb2, kx2 = jax.random.split(key, 6)

    x = jax.random.normal(kx, (B, C, L), dtype=jnp.float32)
    # torch Linear weight is (out, in); we store the transposed (in, out) layout.
    w1 = jax.random.normal(kw1, (C, H), dtype=jnp.float32) * (1.0 / jnp.sqrt(C))
    b1 = jax.random.normal(kb1, (H,), dtype=jnp.float32) * 0.01
    w2 = jax.random.normal(kw2, (H, C), dtype=jnp.float32) * (1.0 / jnp.sqrt(H))
    b2 = jax.random.normal(kb2, (C,), dtype=jnp.float32) * 0.01

    # 1) Fused single-pass path (small L).
    out = jax.block_until_ready(channel_gate(x, w1, b1, w2, b2))
    ref = channel_gate_ref(x, w1, b1, w2, b2)
    assert out.shape == (B, C, L)
    assert jnp.allclose(out, ref, atol=1e-5, rtol=1e-5), "fused mismatch"

    # 2) Streaming two-phase path (tiny budget forces L into 128-lane chunks,
    #    B into per-sample blocks, multi-step reduction accumulators).
    L2 = 384
    x2 = jax.random.normal(kx2, (B, C, L2), dtype=jnp.float32)
    out2 = jax.block_until_ready(
        channel_gate(x2, w1, b1, w2, b2, tile_bytes=16 * 1024))
    ref2 = channel_gate_ref(x2, w1, b1, w2, b2)
    assert jnp.allclose(out2, ref2, atol=1e-5, rtol=1e-5), "streaming mismatch"

    print("KERNEL_OK")
</pallas_src>

<mosaic_0001>
module attributes {stable_mosaic.version = 11 : i64} {
  func.func @kernel(%arg0: i32, %arg1: memref<2x32x16xf32, #tpu.memory_space<vmem>>, %arg2: memref<32x2xf32, #tpu.memory_space<vmem>>, %arg3: memref<1x2xf32, #tpu.memory_space<vmem>>, %arg4: memref<2x32xf32, #tpu.memory_space<vmem>>, %arg5: memref<1x32xf32, #tpu.memory_space<vmem>>, %arg6: memref<2x32x16xf32, #tpu.memory_space<vmem>>) attributes {dimension_semantics = [#tpu.dimension_semantics<parallel>], iteration_bounds = array<i64: 1>, scalar_prefetch = 0 : i64, scratch_operands = 0 : i64, tpu.core_type = #tpu.core_type<tc>, window_params = [{transform_indices = @transform_0, window_bounds = array<i64: 2, 32, 16>}, {pipeline_mode = #tpu.pipeline_mode<synchronous>, transform_indices = @transform_1, window_bounds = array<i64: 32, 2>}, {pipeline_mode = #tpu.pipeline_mode<synchronous>, transform_indices = @transform_2, window_bounds = array<i64: 1, 2>}, {pipeline_mode = #tpu.pipeline_mode<synchronous>, transform_indices = @transform_3, window_bounds = array<i64: 2, 32>}, {pipeline_mode = #tpu.pipeline_mode<synchronous>, transform_indices = @transform_4, window_bounds = array<i64: 1, 32>}, {transform_indices = @transform_5, window_bounds = array<i64: 2, 32, 16>}]} {
    %c0 = arith.constant 0 : index
    %c0_0 = arith.constant 0 : index
    %c0_1 = arith.constant 0 : index
    %0 = vector.load %arg1[%c0, %c0_0, %c0_1] : memref<2x32x16xf32, #tpu.memory_space<vmem>>, vector<2x32x16xf32>
    %cst = arith.constant dense<0.000000e+00> : vector<2x32xf32>
    %1 = vector.multi_reduction <add>, %0, %cst [2] : vector<2x32x16xf32> to vector<2x32xf32>
    %cst_2 = arith.constant 6.250000e-02 : f32
    %2 = vector.broadcast %cst_2 : f32 to vector<2x32xf32>
    %3 = arith.mulf %1, %2 : vector<2x32xf32>
    %cst_3 = arith.constant dense<0xFF800000> : vector<2x32xf32>
    %4 = vector.multi_reduction <maximumf>, %0, %cst_3 [2] : vector<2x32x16xf32> to vector<2x32xf32>
    %c0_4 = arith.constant 0 : index
    %c0_5 = arith.constant 0 : index
    %5 = vector.load %arg2[%c0_4, %c0_5] : memref<32x2xf32, #tpu.memory_space<vmem>>, vector<32x2xf32>
    %cst_6 = arith.constant dense<0.000000e+00> : vector<2x2xf32>
    %6 = tpu.matmul %3, %5, %cst_6 {dimension_numbers = #tpu.dot_dimension_numbers<[1], [0], [0], [1], [0, 0, 1, 1], [], []>} : vector<2x32xf32>, vector<32x2xf32>, vector<2x2xf32> -> vector<2x2xf32>
    %c0_7 = arith.constant 0 : index
    %c0_8 = arith.constant 0 : index
    %7 = vector.load %arg3[%c0_7, %c0_8] : memref<1x2xf32, #tpu.memory_space<vmem>>, vector<1x2xf32>
    %8 = vector.broadcast %7 : vector<1x2xf32> to vector<2x2xf32>
    %9 = arith.addf %6, %8 : vector<2x2xf32>
    %cst_9 = arith.constant 0.000000e+00 : f32
    %10 = vector.broadcast %cst_9 : f32 to vector<2x2xf32>
    %11 = arith.maximumf %9, %10 : vector<2x2xf32>
    %c0_10 = arith.constant 0 : index
    %c0_11 = arith.constant 0 : index
    %12 = vector.load %arg4[%c0_10, %c0_11] : memref<2x32xf32, #tpu.memory_space<vmem>>, vector<2x32xf32>
    %cst_12 = arith.constant dense<0.000000e+00> : vector<2x32xf32>
    %13 = tpu.matmul %11, %12, %cst_12 {dimension_numbers = #tpu.dot_dimension_numbers<[1], [0], [0], [1], [0, 0, 1, 1], [], []>} : vector<2x2xf32>, vector<2x32xf32>, vector<2x32xf32> -> vector<2x32xf32>
    %c0_13 = arith.constant 0 : index
    %c0_14 = arith.constant 0 : index
    %14 = vector.load %arg5[%c0_13, %c0_14] : memref<1x32xf32, #tpu.memory_space<vmem>>, vector<1x32xf32>
    %15 = vector.broadcast %14 : vector<1x32xf32> to vector<2x32xf32>
    %16 = arith.addf %13, %15 : vector<2x32xf32>
    %c0_15 = arith.constant 0 : index
    %c0_16 = arith.constant 0 : index
    %17 = vector.load %arg2[%c0_15, %c0_16] : memref<32x2xf32, #tpu.memory_space<vmem>>, vector<32x2xf32>
    %cst_17 = arith.constant dense<0.000000e+00> : vector<2x2xf32>
    %18 = tpu.matmul %4, %17, %cst_17 {dimension_numbers = #tpu.dot_dimension_numbers<[1], [0], [0], [1], [0, 0, 1, 1], [], []>} : vector<2x32xf32>, vector<32x2xf32>, vector<2x2xf32> -> vector<2x2xf32>
    %c0_18 = arith.constant 0 : index
    %c0_19 = arith.constant 0 : index
    %19 = vector.load %arg3[%c0_18, %c0_19] : memref<1x2xf32, #tpu.memory_space<vmem>>, vector<1x2xf32>
    %20 = vector.broadcast %19 : vector<1x2xf32> to vector<2x2xf32>
    %21 = arith.addf %18, %20 : vector<2x2xf32>
    %cst_20 = arith.constant 0.000000e+00 : f32
    %22 = vector.broadcast %cst_20 : f32 to vector<2x2xf32>
    %23 = arith.maximumf %21, %22 : vector<2x2xf32>
    %c0_21 = arith.constant 0 : index
    %c0_22 = arith.constant 0 : index
    %24 = vector.load %arg4[%c0_21, %c0_22] : memref<2x32xf32, #tpu.memory_space<vmem>>, vector<2x32xf32>
    %cst_23 = arith.constant dense<0.000000e+00> : vector<2x32xf32>
    %25 = tpu.matmul %23, %24, %cst_23 {dimension_numbers = #tpu.dot_dimension_numbers<[1], [0], [0], [1], [0, 0, 1, 1], [], []>} : vector<2x2xf32>, vector<2x32xf32>, vector<2x32xf32> -> vector<2x32xf32>
    %c0_24 = arith.constant 0 : index
    %c0_25 = arith.constant 0 : index
    %26 = vector.load %arg5[%c0_24, %c0_25] : memref<1x32xf32, #tpu.memory_space<vmem>>, vector<1x32xf32>
    %27 = vector.broadcast %26 : vector<1x32xf32> to vector<2x32xf32>
    %28 = arith.addf %25, %27 : vector<2x32xf32>
    %29 = arith.addf %16, %28 : vector<2x32xf32>
    %30 = arith.negf %29 : vector<2x32xf32>
    %31 = math.exp %30 : vector<2x32xf32>
    %cst_26 = arith.constant 1.000000e+00 : f32
    %32 = vector.broadcast %cst_26 : f32 to vector<2x32xf32>
    %33 = arith.addf %32, %31 : vector<2x32xf32>
    %34 = arith.divf %32, %33 : vector<2x32xf32>
    %35 = vector.shape_cast %34 : vector<2x32xf32> to vector<2x32x1xf32>
    %36 = vector.broadcast %35 : vector<2x32x1xf32> to vector<2x32x16xf32>
    %37 = arith.mulf %0, %36 : vector<2x32x16xf32>
    %c0_27 = arith.constant 0 : index
    %c0_28 = arith.constant 0 : index
    %c0_29 = arith.constant 0 : index
    %38 = vector.load %arg6[%c0_27, %c0_28, %c0_29] : memref<2x32x16xf32, #tpu.memory_space<vmem>>, vector<2x32x16xf32>
    tpu.vector_store %arg6[%c0_27, %c0_28, %c0_29], %37 {strides = array<i32>} : memref<2x32x16xf32, #tpu.memory_space<vmem>>, vector<2x32x16xf32>,
    return
  }
  func.func @transform_0(%arg0: i32) -> (i32, i32, i32) {
    %c0_i32 = arith.constant 0 : i32
    %c0_i32_0 = arith.constant 0 : i32
    %c0_i32_1 = arith.constant 0 : i32
    return %arg0, %c0_i32, %c0_i32_0 : i32, i32, i32
  }
  func.func @transform_1(%arg0: i32) -> (i32, i32) {
    %c0_i32 = arith.constant 0 : i32
    %c0_i32_0 = arith.constant 0 : i32
    %c0_i32_1 = arith.constant 0 : i32
    return %c0_i32, %c0_i32_0 : i32, i32
  }
  func.func @transform_2(%arg0: i32) -> (i32, i32) {
    %c0_i32 = arith.constant 0 : i32
    %c0_i32_0 = arith.constant 0 : i32
    %c0_i32_1 = arith.constant 0 : i32
    return %c0_i32, %c0_i32_0 : i32, i32
  }
  func.func @transform_3(%arg0: i32) -> (i32, i32) {
    %c0_i32 = arith.constant 0 : i32
    %c0_i32_0 = arith.constant 0 : i32
    %c0_i32_1 = arith.constant 0 : i32
    return %c0_i32, %c0_i32_0 : i32, i32
  }
  func.func @transform_4(%arg0: i32) -> (i32, i32) {
    %c0_i32 = arith.constant 0 : i32
    %c0_i32_0 = arith.constant 0 : i32
    %c0_i32_1 = arith.constant 0 : i32
    return %c0_i32, %c0_i32_0 : i32, i32
  }
  func.func @transform_5(%arg0: i32) -> (i32, i32, i32) {
    %c0_i32 = arith.constant 0 : i32
    %c0_i32_0 = arith.constant 0 : i32
    %c0_i32_1 = arith.constant 0 : i32
    return %arg0, %c0_i32, %c0_i32_0 : i32, i32, i32
  }
}

</mosaic_0001>

<llo_original>
// kernel: tpu_custom_call.1
$region0: #{tpu_custom_call.1}
  #allocation0 [shape = 'u32[]', space=smem, size = 0x4, offset = 0x4, fixed_abs, tag = 'smem constant byte address 0x4 - core index']
  #allocation1 [shape = 'u32[144,128]{1,0:T(1,128)}', space=vmem, size = 0x12000, scoped, tag = 'internal scratch']
  %s0 = inlined_call_operand.vmem [shape: f32[2,32,16], index: 0, kind: input, shape index: {}]
  %s1 = inlined_call_operand.vmem [shape: f32[32,2], index: 1, kind: input, shape index: {}]
  %s2 = inlined_call_operand.vmem [shape: f32[1,2], index: 2, kind: input, shape index: {}]
  %s3 = inlined_call_operand.vmem [shape: f32[2,32], index: 3, kind: input, shape index: {}]
  %s4 = inlined_call_operand.vmem [shape: f32[1,32], index: 4, kind: input, shape index: {}]
  %s5 = inlined_call_operand.vmem [shape: f32[2,32,16], index: 5, kind: output, shape index: {}]
  %s6 = sld [smem:[#allocation0]]
  $region30: #{tpu_custom_call.1} parent=0
    _
  %s8 = ssub.s32 1, %s6
  %s9 = scalar_select 0, %s8, %s6
  // Predicated region
  $region2: #{tpu_custom_call.1} parent=0 // pred_check
    _
  $region3: #{tpu_custom_call.1} parent=0 // pred_check_branch
    %11 = sbr.rel (0) target = $region5
  $region4: #{tpu_custom_call.1} parent=0 // pred_region
    _
  $region5: #{tpu_custom_call.1} parent=0 // pred_fallthru
    _
  // Predicated region
  $region6: #{tpu_custom_call.1} parent=0 // pred_check
    _
  $region7: #{tpu_custom_call.1} parent=0 // pred_check_branch
    %13 = sbr.rel (0) target = $region9
  $region8: #{tpu_custom_call.1} parent=0 // pred_region
    _
  $region9: #{tpu_custom_call.1} parent=0 // pred_fallthru
    _
  // Predicated region
  $region10: #{tpu_custom_call.1} parent=0 // pred_check
    _
  $region11: #{tpu_custom_call.1} parent=0 // pred_check_branch
    %15 = sbr.rel (0) target = $region13
  $region12: #{tpu_custom_call.1} parent=0 // pred_region
    _
  $region13: #{tpu_custom_call.1} parent=0 // pred_fallthru
    _
  // Predicated region
  $region14: #{tpu_custom_call.1} parent=0 // pred_check
    _
  $region15: #{tpu_custom_call.1} parent=0 // pred_check_branch
    %17 = sbr.rel (0) target = $region17
  $region16: #{tpu_custom_call.1} parent=0 // pred_region
    _
  $region17: #{tpu_custom_call.1} parent=0 // pred_fallthru
    _
  // Predicated region
  $region18: #{tpu_custom_call.1} parent=0 // pred_check
    _
  $region19: #{tpu_custom_call.1} parent=0 // pred_check_branch
    %19 = sbr.rel (0) target = $region21
  $region20: #{tpu_custom_call.1} parent=0 // pred_region
    _
  $region21: #{tpu_custom_call.1} parent=0 // pred_fallthru
    _
  %v20 = vld [vmem:[%s0] sm:$0xff]
  %v21 = vld [vmem:[%s0 + $0x8] sm:$0xff]
  %v22 = vld [vmem:[%s0 + $0x10] sm:$0xff]
  %v23 = vld [vmem:[%s0 + $0x18] sm:$0xff]
  %v24 = vld [vmem:[%s0 + $0x20] sm:$0xff]
  %v25 = vld [vmem:[%s0 + $0x28] sm:$0xff]
  %v26 = vld [vmem:[%s0 + $0x30] sm:$0xff]
  %v27 = vld [vmem:[%s0 + $0x38] sm:$0xff]
  %vm28 = vcmask 130048
  %v29 = vsel %vm28, %v20, 0.0
  %30 = vadd.xlane.f32.xlu0 %v29
  %v31 = vpop.xlane.xlu0 %30
  %v32 = vsel %vm28, %v21, 0.0
  %33 = vadd.xlane.f32.xlu0 %v32
  %v34 = vpop.xlane.xlu0 %33
  %v35 = vsel %vm28, %v22, 0.0
  %36 = vadd.xlane.f32.xlu0 %v35
  %v37 = vpop.xlane.xlu0 %36
  %v38 = vsel %vm28, %v23, 0.0
  %39 = vadd.xlane.f32.xlu0 %v38
  %v40 = vpop.xlane.xlu0 %39
  %v41 = vsel %vm28, %v24, 0.0
  %42 = vadd.xlane.f32.xlu0 %v41
  %v43 = vpop.xlane.xlu0 %42
  %v44 = vsel %vm28, %v25, 0.0
  %45 = vadd.xlane.f32.xlu0 %v44
  %v46 = vpop.xlane.xlu0 %45
  %v47 = vsel %vm28, %v26, 0.0
  %48 = vadd.xlane.f32.xlu0 %v47
  %v49 = vpop.xlane.xlu0 %48
  %v50 = vsel %vm28, %v27, 0.0
  %51 = vadd.xlane.f32.xlu0 %v50
  %v52 = vpop.xlane.xlu0 %51
  %v53 = vmul.f32 %v31, 0.0625
  %v54 = vmul.f32 %v34, 0.0625
  %v55 = vmul.f32 %v37, 0.0625
  %v56 = vmul.f32 %v40, 0.0625
  %v57 = vmul.f32 %v43, 0.0625
  %v58 = vmul.f32 %v46, 0.0625
  %v59 = vmul.f32 %v49, 0.0625
  %v60 = vmul.f32 %v52, 0.0625
  %v61 = vsel %vm28, %v20, -inf
  %62 = vmax.xlane.f32.xlu0 %v61
  %v63 = vpop.xlane.xlu0 %62
  %v64 = vsel %vm28, %v21, -inf
  %65 = vmax.xlane.f32.xlu0 %v64
  %v66 = vpop.xlane.xlu0 %65
  %v67 = vsel %vm28, %v22, -inf
  %68 = vmax.xlane.f32.xlu0 %v67
  %v69 = vpop.xlane.xlu0 %68
  %v70 = vsel %vm28, %v23, -inf
  %71 = vmax.xlane.f32.xlu0 %v70
  %v72 = vpop.xlane.xlu0 %71
  %v73 = vsel %vm28, %v24, -inf
  %74 = vmax.xlane.f32.xlu0 %v73
  %v75 = vpop.xlane.xlu0 %74
  %v76 = vsel %vm28, %v25, -inf
  %77 = vmax.xlane.f32.xlu0 %v76
  %v78 = vpop.xlane.xlu0 %77
  %v79 = vsel %vm28, %v26, -inf
  %80 = vmax.xlane.f32.xlu0 %v79
  %v81 = vpop.xlane.xlu0 %80
  %v82 = vsel %vm28, %v27, -inf
  %83 = vmax.xlane.f32.xlu0 %v82
  %v84 = vpop.xlane.xlu0 %83
  %v85 = vld [vmem:[%s1] sm:$0xff]
  %v86 = vld [vmem:[%s1 + $0x8] sm:$0xff]
  %v87 = vld [vmem:[%s1 + $0x10] sm:$0xff]
  %v88 = vld [vmem:[%s1 + $0x18] sm:$0xff]
  %v89 = vld [vmem:[%s2] sm:$0x1]
  %v91 = vlaneseq
  %v92 = vshrl.u32 %v91, 7
  %v93 = vsub.s32 0, %v92
  %v94 = vrot.slane %v89, %v93
  %v104 = vlaneseq
  %v105 = vand.u32 %v104, 127
  %v106 = vlaneseq
  %v107 = vshrl.u32 %v106, 7
  %v108 = vsub.s32 %v105, %v107
  %v109 = vrot.slane %v53, %v108
  %v110 = vadd.s32 %v105, 4294967288
  %v111 = vlaneseq
  %v112 = vshrl.u32 %v111, 7
  %v113 = vsub.s32 %v110, %v112
  %v114 = vrot.slane %v54, %v113
  %vm115 = vcmask 130112
  %v116 = vsel %vm115, %v114, %v109
  %v117 = vadd.s32 %v105, 4294967280
  %v118 = vlaneseq
  %v119 = vshrl.u32 %v118, 7
  %v120 = vsub.s32 %v117, %v119
  %v121 = vrot.slane %v55, %v120
  %vm122 = vcmask 195712
  %v123 = vsel %vm122, %v121, %v116
  %v124 = vadd.s32 %v105, 4294967272
  %v125 = vlaneseq
  %v126 = vshrl.u32 %v125, 7
  %v127 = vsub.s32 %v124, %v126
  %v128 = vrot.slane %v56, %v127
  %vm129 = vcmask 261312
  %v130 = vsel %vm129, %v128, %v123
  %v131 = vlaneseq
  %v132 = vshrl.u32 %v131, 7
  %v133 = vsub.s32 %v105, %v132
  %v134 = vrot.slane %v57, %v133
  %v135 = vlaneseq
  %v136 = vshrl.u32 %v135, 7
  %v137 = vsub.s32 %v110, %v136
  %v138 = vrot.slane %v58, %v137
  %v139 = vsel %vm115, %v138, %v134
  %v140 = vlaneseq
  %v141 = vshrl.u32 %v140, 7
  %v142 = vsub.s32 %v117, %v141
  %v143 = vrot.slane %v59, %v142
  %v144 = vsel %vm122, %v143, %v139
  %v145 = vlaneseq
  %v146 = vshrl.u32 %v145, 7
  %v147 = vsub.s32 %v124, %v146
  %v148 = vrot.slane %v60, %v147
  %v149 = vsel %vm129, %v148, %v144
  %vm150 = vcmask 1041409
  %v151 = vsel %vm150, %v149, %v130
  %vm152 = vcmask 261120
  %v153 = vsel %vm152, %v151, 0
  %155 = vmatprep.subr.mxu0 0.0
  %156 = vmatpush1.msra.mxu0 0.0
  %157 = vmatprep.subr.mxu0 0.0
  %158 = vmatpush1.msra.mxu0 0.0
  %159 = vmatprep.subr.mxu0 0.0
  %160 = vmatpush1.msra.mxu0 0.0
  %161 = vmatprep.subr.mxu0 0.0
  %162 = vmatpush1.msra.mxu0 0.0
  %163 = vmatprep.subr.mxu0 0.0
  %164 = vmatpush1.msra.mxu0 0.0
  %165 = vmatprep.subr.mxu0 0.0
  %166 = vmatpush1.msra.mxu0 0.0
  %167 = vmatprep.subr.mxu0 0.0
  %168 = vmatpush1.msra.mxu0 0.0
  %169 = vmatprep.subr.mxu0 0.0
  %170 = vmatpush1.msra.mxu0 0.0
  %171 = vmatprep.subr.mxu0 0.0
  %172 = vmatpush1.msra.mxu0 0.0
  %173 = vmatprep.subr.mxu0 0.0
  %174 = vmatpush1.msra.mxu0 0.0
  %175 = vmatprep.subr.mxu0 0.0
  %176 = vmatpush1.msra.mxu0 0.0
  %177 = vmatprep.subr.mxu0 0.0
  %178 = vmatpush1.msra.mxu0 0.0
  %179 = vmatprep.subr.mxu0 0.0
  %180 = vmatpush1.msra.mxu0 %v88
  %181 = vmatprep.subr.mxu0 0.0
  %182 = vmatpush1.msra.mxu0 %v87
  %183 = vmatprep.subr.mxu0 0.0
  %184 = vmatpush1.msra.mxu0 %v86
  %185 = vmatprep.subr.mxu0 0.0
  %186 = vmatpush1.msra.mxu0 %v85
  %187 = vmatprep.subr.mxu0 0.0
  %188 = vmatpush2.msra.mxu0 0.0
  %189 = vmatprep.subr.mxu0 0.0
  %190 = vmatpush2.msra.mxu0 0.0
  %191 = vmatprep.subr.mxu0 0.0
  %192 = vmatpush2.msra.mxu0 0.0
  %193 = vmatprep.subr.mxu0 0.0
  %194 = vmatpush2.msra.mxu0 0.0
  %195 = vmatprep.subr.mxu0 0.0
  %196 = vmatpush2.msra.mxu0 0.0
  %197 = vmatprep.subr.mxu0 0.0
  %198 = vmatpush2.msra.mxu0 0.0
  %199 = vmatprep.subr.mxu0 0.0
  %200 = vmatpush2.msra.mxu0 0.0
  %201 = vmatprep.subr.mxu0 0.0
  %202 = vmatpush2.msra.mxu0 0.0
  %203 = vmatprep.subr.mxu0 0.0
  %204 = vmatpush2.msra.mxu0 0.0
  %205 = vmatprep.subr.mxu0 0.0
  %206 = vmatpush2.msra.mxu0 0.0
  %207 = vmatprep.subr.mxu0 0.0
  %208 = vmatpush2.msra.mxu0 0.0
  %209 = vmatprep.subr.mxu0 0.0
  %210 = vmatpush2.msra.mxu0 0.0
  %211 = vmatprep.subr.mxu0 0.0
  %212 = vmatpush2.msra.mxu0 0.0
  %213 = vmatprep.subr.mxu0 0.0
  %214 = vmatpush2.msra.mxu0 0.0
  %215 = vmatprep.subr.mxu0 0.0
  %216 = vmatpush2.msra.mxu0 0.0
  %217 = vmatprep.subr.mxu0 0.0
  %218 = vmatpush2.msra.mxu0 0.0
  %219 = vmatprep.mubr.f32.mxu0 0.0
  %220 = vmatmul.mubr.f32.gmra.mxu0 %v153
  %v221 = vpop.f32.mrf.mxu0
  %v222 = vadd.f32 %v94, %v221
  %v223 = vpop.f32.mrf.mxu0
  %224 = vdwg.mxu0
  %v225 = vmax.f32 %v222, 0.0
  %v226 = vld [vmem:[%s3] sm:$0x3]
  %v227 = vld [vmem:[%s4] sm:$0x1]
  %v229 = vlaneseq
  %v230 = vshrl.u32 %v229, 7
  %v231 = vsub.s32 0, %v230
  %v232 = vrot.slane %v227, %v231
  %vm234 = vcmask 15360
  %v236 = vsel %vm234, %v225, 0
  %vm238 = vcmask 1041408
  %v240 = vsel %vm238, %v226, 0
  %242 = vmatprep.subr.mxu0 0.0
  %243 = vmatpush1.msra.mxu0 0.0
  %244 = vmatprep.subr.mxu0 0.0
  %245 = vmatpush1.msra.mxu0 0.0
  %246 = vmatprep.subr.mxu0 0.0
  %247 = vmatpush1.msra.mxu0 0.0
  %248 = vmatprep.subr.mxu0 0.0
  %249 = vmatpush1.msra.mxu0 0.0
  %250 = vmatprep.subr.mxu0 0.0
  %251 = vmatpush1.msra.mxu0 0.0
  %252 = vmatprep.subr.mxu0 0.0
  %253 = vmatpush1.msra.mxu0 0.0
  %254 = vmatprep.subr.mxu0 0.0
  %255 = vmatpush1.msra.mxu0 0.0
  %256 = vmatprep.subr.mxu0 0.0
  %257 = vmatpush1.msra.mxu0 0.0
  %258 = vmatprep.subr.mxu0 0.0
  %259 = vmatpush1.msra.mxu0 0.0
  %260 = vmatprep.subr.mxu0 0.0
  %261 = vmatpush1.msra.mxu0 0.0
  %262 = vmatprep.subr.mxu0 0.0
  %263 = vmatpush1.msra.mxu0 0.0
  %264 = vmatprep.subr.mxu0 0.0
  %265 = vmatpush1.msra.mxu0 0.0
  %266 = vmatprep.subr.mxu0 0.0
  %267 = vmatpush1.msra.mxu0 0.0
  %268 = vmatprep.subr.mxu0 0.0
  %269 = vmatpush1.msra.mxu0 0.0
  %270 = vmatprep.subr.mxu0 0.0
  %271 = vmatpush1.msra.mxu0 0.0
  %272 = vmatprep.subr.mxu0 0.0
  %273 = vmatpush1.msra.mxu0 %v240
  %274 = vmatprep.subr.mxu0 0.0
  %275 = vmatpush2.msra.mxu0 0.0
  %276 = vmatprep.subr.mxu0 0.0
  %277 = vmatpush2.msra.mxu0 0.0
  %278 = vmatprep.subr.mxu0 0.0
  %279 = vmatpush2.msra.mxu0 0.0
  %280 = vmatprep.subr.mxu0 0.0
  %281 = vmatpush2.msra.mxu0 0.0
  %282 = vmatprep.subr.mxu0 0.0
  %283 = vmatpush2.msra.mxu0 0.0
  %284 = vmatprep.subr.mxu0 0.0
  %285 = vmatpush2.msra.mxu0 0.0
  %286 = vmatprep.subr.mxu0 0.0
  %287 = vmatpush2.msra.mxu0 0.0
  %288 = vmatprep.subr.mxu0 0.0
  %289 = vmatpush2.msra.mxu0 0.0
  %290 = vmatprep.subr.mxu0 0.0
  %291 = vmatpush2.msra.mxu0 0.0
  %292 = vmatprep.subr.mxu0 0.0
  %293 = vmatpush2.msra.mxu0 0.0
  %294 = vmatprep.subr.mxu0 0.0
  %295 = vmatpush2.msra.mxu0 0.0
  %296 = vmatprep.subr.mxu0 0.0
  %297 = vmatpush2.msra.mxu0 0.0
  %298 = vmatprep.subr.mxu0 0.0
  %299 = vmatpush2.msra.mxu0 0.0
  %300 = vmatprep.subr.mxu0 0.0
  %301 = vmatpush2.msra.mxu0 0.0
  %302 = vmatprep.subr.mxu0 0.0
  %303 = vmatpush2.msra.mxu0 0.0
  %304 = vmatprep.subr.mxu0 0.0
  %305 = vmatpush2.msra.mxu0 0.0
  %306 = vmatprep.mubr.f32.mxu0 0.0
  %307 = vmatmul.mubr.f32.gmra.mxu0 %v236
  %v308 = vpop.f32.mrf.mxu0
  %v309 = vadd.f32 %v232, %v308
  %v310 = vpop.f32.mrf.mxu0
  %311 = vdwg.mxu0
  %v320 = vlaneseq
  %v321 = vshrl.u32 %v320, 7
  %v322 = vsub.s32 %v105, %v321
  %v323 = vrot.slane %v63, %v322
  %v324 = vlaneseq
  %v325 = vshrl.u32 %v324, 7
  %v326 = vsub.s32 %v110, %v325
  %v327 = vrot.slane %v66, %v326
  %v328 = vsel %vm115, %v327, %v323
  %v329 = vlaneseq
  %v330 = vshrl.u32 %v329, 7
  %v331 = vsub.s32 %v117, %v330
  %v332 = vrot.slane %v69, %v331
  %v333 = vsel %vm122, %v332, %v328
  %v334 = vlaneseq
  %v335 = vshrl.u32 %v334, 7
  %v336 = vsub.s32 %v124, %v335
  %v337 = vrot.slane %v72, %v336
  %v338 = vsel %vm129, %v337, %v333
  %v339 = vlaneseq
  %v340 = vshrl.u32 %v339, 7
  %v341 = vsub.s32 %v105, %v340
  %v342 = vrot.slane %v75, %v341
  %v343 = vlaneseq
  %v344 = vshrl.u32 %v343, 7
  %v345 = vsub.s32 %v110, %v344
  %v346 = vrot.slane %v78, %v345
  %v347 = vsel %vm115, %v346, %v342
  %v348 = vlaneseq
  %v349 = vshrl.u32 %v348, 7
  %v350 = vsub.s32 %v117, %v349
  %v351 = vrot.slane %v81, %v350
  %v352 = vsel %vm122, %v351, %v347
  %v353 = vlaneseq
  %v354 = vshrl.u32 %v353, 7
  %v355 = vsub.s32 %v124, %v354
  %v356 = vrot.slane %v84, %v355
  %v357 = vsel %vm129, %v356, %v352
  %v358 = vsel %vm150, %v357, %v338
  %v359 = vsel %vm152, %v358, 0
  %361 = vmatprep.subr.mxu0 0.0
  %362 = vmatpush1.msra.mxu0 0.0
  %363 = vmatprep.subr.mxu0 0.0
  %364 = vmatpush1.msra.mxu0 0.0
  %365 = vmatprep.subr.mxu0 0.0
  %366 = vmatpush1.msra.mxu0 0.0
  %367 = vmatprep.subr.mxu0 0.0
  %368 = vmatpush1.msra.mxu0 0.0
  %369 = vmatprep.subr.mxu0 0.0
  %370 = vmatpush1.msra.mxu0 0.0
  %371 = vmatprep.subr.mxu0 0.0
  %372 = vmatpush1.msra.mxu0 0.0
  %373 = vmatprep.subr.mxu0 0.0
  %374 = vmatpush1.msra.mxu0 0.0
  %375 = vmatprep.subr.mxu0 0.0
  %376 = vmatpush1.msra.mxu0 0.0
  %377 = vmatprep.subr.mxu0 0.0
  %378 = vmatpush1.msra.mxu0 0.0
  %379 = vmatprep.subr.mxu0 0.0
  %380 = vmatpush1.msra.mxu0 0.0
  %381 = vmatprep.subr.mxu0 0.0
  %382 = vmatpush1.msra.mxu0 0.0
  %383 = vmatprep.subr.mxu0 0.0
  %384 = vmatpush1.msra.mxu0 0.0
  %385 = vmatprep.subr.mxu0 0.0
  %386 = vmatpush1.msra.mxu0 %v88
  %387 = vmatprep.subr.mxu0 0.0
  %388 = vmatpush1.msra.mxu0 %v87
  %389 = vmatprep.subr.mxu0 0.0
  %390 = vmatpush1.msra.mxu0 %v86
  %391 = vmatprep.subr.mxu0 0.0
  %392 = vmatpush1.msra.mxu0 %v85
  %393 = vmatprep.subr.mxu0 0.0
  %394 = vmatpush2.msra.mxu0 0.0
  %395 = vmatprep.subr.mxu0 0.0
  %396 = vmatpush2.msra.mxu0 0.0
  %397 = vmatprep.subr.mxu0 0.0
  %398 = vmatpush2.msra.mxu0 0.0
  %399 = vmatprep.subr.mxu0 0.0
  %400 = vmatpush2.msra.mxu0 0.0
  %401 = vmatprep.subr.mxu0 0.0
  %402 = vmatpush2.msra.mxu0 0.0
  %403 = vmatprep.subr.mxu0 0.0
  %404 = vmatpush2.msra.mxu0 0.0
  %405 = vmatprep.subr.mxu0 0.0
  %406 = vmatpush2.msra.mxu0 0.0
  %407 = vmatprep.subr.mxu0 0.0
  %408 = vmatpush2.msra.mxu0 0.0
  %409 = vmatprep.subr.mxu0 0.0
  %410 = vmatpush2.msra.mxu0 0.0
  %411 = vmatprep.subr.mxu0 0.0
  %412 = vmatpush2.msra.mxu0 0.0
  %413 = vmatprep.subr.mxu0 0.0
  %414 = vmatpush2.msra.mxu0 0.0
  %415 = vmatprep.subr.mxu0 0.0
  %416 = vmatpush2.msra.mxu0 0.0
  %417 = vmatprep.subr.mxu0 0.0
  %418 = vmatpush2.msra.mxu0 0.0
  %419 = vmatprep.subr.mxu0 0.0
  %420 = vmatpush2.msra.mxu0 0.0
  %421 = vmatprep.subr.mxu0 0.0
  %422 = vmatpush2.msra.mxu0 0.0
  %423 = vmatprep.subr.mxu0 0.0
  %424 = vmatpush2.msra.mxu0 0.0
  %425 = vmatprep.mubr.f32.mxu0 0.0
  %426 = vmatmul.mubr.f32.gmra.mxu0 %v359
  %v427 = vpop.f32.mrf.mxu0
  %v428 = vadd.f32 %v94, %v427
  %v429 = vpop.f32.mrf.mxu0
  %430 = vdwg.mxu0
  %v431 = vmax.f32 %v428, 0.0
  %v433 = vsel %vm234, %v431, 0
  %435 = vmatprep.subr.mxu0 0.0
  %436 = vmatpush1.msra.mxu0 0.0
  %437 = vmatprep.subr.mxu0 0.0
  %438 = vmatpush1.msra.mxu0 0.0
  %439 = vmatprep.subr.mxu0 0.0
  %440 = vmatpush1.msra.mxu0 0.0
  %441 = vmatprep.subr.mxu0 0.0
  %442 = vmatpush1.msra.mxu0 0.0
  %443 = vmatprep.subr.mxu0 0.0
  %444 = vmatpush1.msra.mxu0 0.0
  %445 = vmatprep.subr.mxu0 0.0
  %446 = vmatpush1.msra.mxu0 0.0
  %447 = vmatprep.subr.mxu0 0.0
  %448 = vmatpush1.msra.mxu0 0.0
  %449 = vmatprep.subr.mxu0 0.0
  %450 = vmatpush1.msra.mxu0 0.0
  %451 = vmatprep.subr.mxu0 0.0
  %452 = vmatpush1.msra.mxu0 0.0
  %453 = vmatprep.subr.mxu0 0.0
  %454 = vmatpush1.msra.mxu0 0.0
  %455 = vmatprep.subr.mxu0 0.0
  %456 = vmatpush1.msra.mxu0 0.0
  %457 = vmatprep.subr.mxu0 0.0
  %458 = vmatpush1.msra.mxu0 0.0
  %459 = vmatprep.subr.mxu0 0.0
  %460 = vmatpush1.msra.mxu0 0.0
  %461 = vmatprep.subr.mxu0 0.0
  %462 = vmatpush1.msra.mxu0 0.0
  %463 = vmatprep.subr.mxu0 0.0
  %464 = vmatpush1.msra.mxu0 0.0
  %465 = vmatprep.subr.mxu0 0.0
  %466 = vmatpush1.msra.mxu0 %v240
  %467 = vmatprep.subr.mxu0 0.0
  %468 = vmatpush2.msra.mxu0 0.0
  %469 = vmatprep.subr.mxu0 0.0
  %470 = vmatpush2.msra.mxu0 0.0
  %471 = vmatprep.subr.mxu0 0.0
  %472 = vmatpush2.msra.mxu0 0.0
  %473 = vmatprep.subr.mxu0 0.0
  %474 = vmatpush2.msra.mxu0 0.0
  %475 = vmatprep.subr.mxu0 0.0
  %476 = vmatpush2.msra.mxu0 0.0
  %477 = vmatprep.subr.mxu0 0.0
  %478 = vmatpush2.msra.mxu0 0.0
  %479 = vmatprep.subr.mxu0 0.0
  %480 = vmatpush2.msra.mxu0 0.0
  %481 = vmatprep.subr.mxu0 0.0
  %482 = vmatpush2.msra.mxu0 0.0
  %483 = vmatprep.subr.mxu0 0.0
  %484 = vmatpush2.msra.mxu0 0.0
  %485 = vmatprep.subr.mxu0 0.0
  %486 = vmatpush2.msra.mxu0 0.0
  %487 = vmatprep.subr.mxu0 0.0
  %488 = vmatpush2.msra.mxu0 0.0
  %489 = vmatprep.subr.mxu0 0.0
  %490 = vmatpush2.msra.mxu0 0.0
  %491 = vmatprep.subr.mxu0 0.0
  %492 = vmatpush2.msra.mxu0 0.0
  %493 = vmatprep.subr.mxu0 0.0
  %494 = vmatpush2.msra.mxu0 0.0
  %495 = vmatprep.subr.mxu0 0.0
  %496 = vmatpush2.msra.mxu0 0.0
  %497 = vmatprep.subr.mxu0 0.0
  %498 = vmatpush2.msra.mxu0 0.0
  %499 = vmatprep.mubr.f32.mxu0 0.0
  %500 = vmatmul.mubr.f32.gmra.mxu0 %v433
  %v501 = vpop.f32.mrf.mxu0
  %v502 = vadd.f32 %v232, %v501
  %v503 = vpop.f32.mrf.mxu0
  %504 = vdwg.mxu0
  %v505 = vadd.f32 %v309, %v502
  %v506 = vxor.u32 %v505, 2147483648
  %v507 = vmul.f32 %v506, 1.442695
  %v508 = vpow.pop %v507
  %v509 = vadd.f32 %v508, 1.0
  %v510 = vrcp.pop %v509
  %v511 = vmul.f32 1.0, %v510
  %v512 = vlaneseq
  %v513 = vshrl.u32 %v512, 7
  %v514 = vsub.s32 0, %v513
  %v515 = vrot.slane %v511, %v514
  %517 = vbcast.lane.b32.xlu0 %v515, 256
  %v518 = vpop.permute.xlu0 %517
  %s520 = sor.u32 256, 8
  %521 = vbcast.lane.b32.xlu0 %v515, %s520
  %v522 = vpop.permute.xlu0 %521
  %s524 = sor.u32 256, 16
  %525 = vbcast.lane.b32.xlu0 %v515, %s524
  %v526 = vpop.permute.xlu0 %525
  %s528 = sor.u32 256, 24
  %529 = vbcast.lane.b32.xlu0 %v515, %s528
  %v530 = vpop.permute.xlu0 %529
  %v531 = vlaneseq
  %v532 = vshrl.u32 %v531, 7
  %v533 = vsub.s32 1, %v532
  %v534 = vrot.slane %v511, %v533
  %536 = vbcast.lane.b32.xlu0 %v534, 256
  %v537 = vpop.permute.xlu0 %536
  %s539 = sor.u32 256, 8
  %540 = vbcast.lane.b32.xlu0 %v534, %s539
  %v541 = vpop.permute.xlu0 %540
  %s543 = sor.u32 256, 16
  %544 = vbcast.lane.b32.xlu0 %v534, %s543
  %v545 = vpop.permute.xlu0 %544
  %s547 = sor.u32 256, 24
  %548 = vbcast.lane.b32.xlu0 %v534, %s547
  %v549 = vpop.permute.xlu0 %548
  %v550 = vmul.f32 %v20, %v518
  %v551 = vmul.f32 %v21, %v522
  %v552 = vmul.f32 %v22, %v526
  %v553 = vmul.f32 %v23, %v530
  %v554 = vmul.f32 %v24, %v537
  %v555 = vmul.f32 %v25, %v541
  %v556 = vmul.f32 %v26, %v545
  %v557 = vmul.f32 %v27, %v549
  %558 = vst.msk [vmem:[%s5] sm:$0xff] %vm28, %v550
  %559 = vst.msk [vmem:[%s5 + $0x8] sm:$0xff] %vm28, %v551
  %560 = vst.msk [vmem:[%s5 + $0x10] sm:$0xff] %vm28, %v552
  %561 = vst.msk [vmem:[%s5 + $0x18] sm:$0xff] %vm28, %v553
  %562 = vst.msk [vmem:[%s5 + $0x20] sm:$0xff] %vm28, %v554
  %563 = vst.msk [vmem:[%s5 + $0x28] sm:$0xff] %vm28, %v555
  %564 = vst.msk [vmem:[%s5 + $0x30] sm:$0xff] %vm28, %v556
  %565 = vst.msk [vmem:[%s5 + $0x38] sm:$0xff] %vm28, %v557
  // Predicated region
  $region22: #{tpu_custom_call.1} parent=0 // pred_check
    _
  $region23: #{tpu_custom_call.1} parent=0 // pred_check_branch
    %567 = sbr.rel (0) target = $region25
  $region24: #{tpu_custom_call.1} parent=0 // pred_region
    _
  $region25: #{tpu_custom_call.1} parent=0 // pred_fallthru
    _
  // Predicated region
  $region26: #{tpu_custom_call.1} parent=0 // pred_check
    _
  $region27: #{tpu_custom_call.1} parent=0 // pred_check_branch
    %569 = sbr.rel (0) target = $region29
  $region28: #{tpu_custom_call.1} parent=0 // pred_region
    _
  $region29: #{tpu_custom_call.1} parent=0 // pred_fallthru
    _

</llo_original>
